<compile_context>
chip_gen: v7x
topology: tpu7x:2x2x1
jax: 0.10.0
libtpu: 0.0.40
codegen_flags: <defaults>
</compile_context>

<pallas_src>
import jax
import jax.numpy as jnp
from jax.experimental import pallas as pl
from jax.experimental.pallas import tpu as pltpu

EPS = 1e-5  # nn.BatchNorm2d default eps


# ---------------------------------------------------------------------------
# Generation-aware VMEM budget (v5e/v6e: 128 MiB, v7x: 64 MiB per TensorCore).
# ---------------------------------------------------------------------------
def _vmem_limit_bytes():
    cap = 64 * 1024 * 1024  # safe floor = v7x physical VMEM per TC
    try:
        cap = int(pltpu.get_tpu_info().vmem_capacity_bytes)
    except Exception:
        pass
    return int(min(100 * 1024 * 1024, (cap * 3) // 4))


# ---------------------------------------------------------------------------
# Wrapper-side helpers (tiny XLA ops: BN folding, stride>1 patch extraction).
# ---------------------------------------------------------------------------
def _fold_bn(w, gamma, beta, mean, var):
    """Fold eval-mode BatchNorm into the conv weight (out-channel axis 0) and a bias."""
    scale = gamma * jax.lax.rsqrt(var + EPS)
    return (w * scale.reshape((-1,) + (1,) * (w.ndim - 1)),
            beta - mean * scale)


def _extract_patches_nchw(x, stride):
    """3x3 / padding=1 im2col: (N, C, H, W) -> (N, 9*C, Ho*Wo), tap-major rows.

    Only used for the strided conv1 (2.25x the input bytes); all stride-1 taps are
    formed inside the kernel.
    """
    n, c, h, w = x.shape
    ho = (h - 1) // stride + 1
    wo = (w - 1) // stride + 1
    xp = jnp.pad(x, ((0, 0), (0, 0), (1, 1), (1, 1)))
    taps = []
    for kh in range(3):
        for kw in range(3):
            taps.append(jax.lax.slice(
                xp, (0, 0, kh, kw),
                (n, c, kh + (ho - 1) * stride + 1, kw + (wo - 1) * stride + 1),
                (1, 1, stride, stride)))
    return jnp.concatenate(taps, axis=1).reshape(n, 9 * c, ho * wo), ho, wo


# ---------------------------------------------------------------------------
# Fused ResidualBlock forward.
# ---------------------------------------------------------------------------
def residual_block_forward(x, params, *, stride=1, residual=True, residual_type="b",
                           batchnorm=True, compute_dtype=jnp.bfloat16):
    n, c_in, h, w = x.shape
    w1 = params["w1"]
    c_out = w1.shape[0]
    out_dtype = x.dtype
    cdt = compute_dtype
    ho = (h - 1) // stride + 1
    wo = (w - 1) // stride + 1
    p = ho * wo

    # ---- residual mode (mirrors the PyTorch forward's shape check) -----------
    if not residual:
        res_mode = "none"
    elif c_in == c_out and stride == 1:
        res_mode = "identity"
    elif residual_type.lower() == "a":
        res_mode = "pad"       # DownsampleA: subsample + zero-pad channels
    else:
        res_mode = "proj"      # DownsampleB ('b'/'c'): 1x1 conv + BN

    # ---- fold BatchNorm (eval-mode) into effective weights / biases ----------
    if batchnorm:
        w1f, b1 = _fold_bn(w1, params["g1"], params["b1"], params["m1"], params["v1"])
        w2f, b2 = _fold_bn(params["w2"], params["g2"], params["b2"],
                           params["m2"], params["v2"])
    else:
        w1f = w1
        b1 = params.get("cb1", jnp.zeros((c_out,), jnp.float32))
        w2f = params["w2"]
        b2 = params.get("cb2", jnp.zeros((c_out,), jnp.float32))

    wpf = None
    if res_mode == "proj":
        wpf, bp = _fold_bn(params["wp"].reshape(c_out, c_in),
                           params["gp"], params["bp"], params["mp"], params["vp"])
        b2 = b2 + bp                       # projection-BN bias folds into conv2 bias
        wpf = wpf.astype(cdt)

    # conv2 weights as per-tap (9, C_out, C_out) slabs -> one resident dot per tap.
    w2t = jnp.transpose(w2f, (2, 3, 0, 1)).reshape(9, c_out, c_out).astype(cdt)

    # conv1 LHS (bf16 by default):
    if stride == 1:
        # Zero-pad one row top/bottom, flatten pixels, add one sentinel element each
        # end -> every 3x3 tap becomes a constant flat shift of this single slab.
        lhs = jnp.pad(x, ((0, 0), (0, 0), (1, 1), (0, 0))).reshape(n, c_in, (h + 2) * w)
        lhs = jnp.pad(lhs, ((0, 0), (0, 0), (1, 1))).astype(cdt)   # (N, C_in, (H+2)*W+2)
        w1t = jnp.transpose(w1f, (2, 3, 0, 1)).reshape(9, c_out, c_in).astype(cdt)
    else:
        lhs, _, _ = _extract_patches_nchw(x, stride)               # (N, 9*C_in, P)
        lhs = lhs.astype(cdt)
        w1t = jnp.transpose(w1f, (0, 2, 3, 1)).reshape(c_out, 9 * c_in).astype(cdt)

    b1_2d = b1.reshape(c_out, 1).astype(jnp.float32)
    b2_2d = b2.reshape(c_out, 1).astype(jnp.float32)

    # Column-wrap masks over the (Ho, Wo) output grid: kw=0 taps must not read the
    # previous row's last pixel (ow==0), kw=2 taps not the next row's first (ow==Wo-1).
    col = jnp.arange(p, dtype=jnp.int32) % wo
    masks = jnp.stack([(col != 0), (col != wo - 1)]).astype(cdt)    # (2, P)

    front = ((wo + 1 + 127) // 128) * 128   # 128-aligned interior offset of out1 slab
    scr_w = front + p + wo + 1

    def kernel(*refs):
        if res_mode == "proj":
            x_ref, w1_ref, b1_ref, w2_ref, b2_ref, m_ref, wp_ref, o_ref, scr_ref = refs
        else:
            x_ref, w1_ref, b1_ref, w2_ref, b2_ref, m_ref, o_ref, scr_ref = refs

        mask_l = m_ref[0:1, :]      # (1, P), kills ow == 0
        mask_r = m_ref[1:2, :]      # (1, P), kills ow == Wo-1

        # ---------------- conv1 + BN1 + ReLU ----------------
        if stride == 1:
            acc1 = jnp.zeros((c_out, p), jnp.float32)
            for kh in range(3):
                for kw in range(3):
                    tap = x_ref[:, kh * w + kw: kh * w + kw + p]     # flat-shifted tap
                    if kw == 0:
                        tap = tap * mask_l
                    elif kw == 2:
                        tap = tap * mask_r
                    acc1 = acc1 + jnp.dot(w1_ref[kh * 3 + kw], tap,
                                          preferred_element_type=jnp.float32)
        else:
            acc1 = jnp.dot(w1_ref[...], x_ref[...],
                           preferred_element_type=jnp.float32)
        out1 = jnp.maximum(acc1 + b1_ref[...], 0.0).astype(scr_ref.dtype)

        # out1 never leaves the chip: zero-padded flat slab in VMEM scratch.
        scr_ref[...] = jnp.zeros(scr_ref.shape, scr_ref.dtype)
        scr_ref[:, front:front + p] = out1

        # ---------------- conv2 + BN2 (+ residual) + ReLU ----------------
        acc2 = jnp.zeros((c_out, p), jnp.float32)
        for kh in range(3):
            for kw in range(3):
                d = front + (kh - 1) * wo + (kw - 1)
                tap = scr_ref[:, d:d + p]
                if kw == 0:
                    tap = tap * mask_l
                elif kw == 2:
                    tap = tap * mask_r
                acc2 = acc2 + jnp.dot(w2_ref[kh * 3 + kw], tap,
                                      preferred_element_type=jnp.float32)
        acc2 = acc2 + b2_ref[...]

        if res_mode != "none":
            # The skip-path input is already resident in VMEM:
            if stride == 1:
                res = x_ref[:, w + 1: w + 1 + p]        # interior of padded conv1 slab
            else:
                res = x_ref[4 * c_in: 5 * c_in, :]      # centre tap == x[:, ::s, ::s]
            if res_mode == "identity":
                acc2 = acc2 + res.astype(jnp.float32)
            elif res_mode == "proj":                    # DownsampleB: tiny resident dot
                acc2 = acc2 + jnp.dot(wp_ref[...], res,
                                      preferred_element_type=jnp.float32)
            else:                                        # DownsampleA: zero-pad channels
                res32 = res.astype(jnp.float32)
                if c_out > c_in:
                    res32 = jnp.concatenate(
                        [res32, jnp.zeros((c_out - c_in, p), jnp.float32)], axis=0)
                acc2 = acc2 + res32

        o_ref[...] = jnp.maximum(acc2, 0.0).astype(o_ref.dtype)

    w1_blk = tuple(w1t.shape)
    w1_zero = (0,) * w1t.ndim
    operands = [lhs, w1t, b1_2d, w2t, b2_2d, masks]
    in_specs = [
        pl.BlockSpec((None,) + tuple(lhs.shape[1:]), lambda i: (i, 0, 0)),
        pl.BlockSpec(w1_blk, lambda i: w1_zero),
        pl.BlockSpec((c_out, 1), lambda i: (0, 0)),
        pl.BlockSpec((9, c_out, c_out), lambda i: (0, 0, 0)),
        pl.BlockSpec((c_out, 1), lambda i: (0, 0)),
        pl.BlockSpec((2, p), lambda i: (0, 0)),
    ]
    if res_mode == "proj":
        operands.append(wpf)
        in_specs.append(pl.BlockSpec((c_out, c_in), lambda i: (0, 0)))

    out = pl.pallas_call(
        kernel,
        out_shape=jax.ShapeDtypeStruct((n, c_out, p), out_dtype),
        grid=(n,),                                   # per-image; N>=2 feeds both v7x TCs
        in_specs=in_specs,
        out_specs=pl.BlockSpec((None, c_out, p), lambda i: (i, 0, 0)),
        scratch_shapes=[pltpu.VMEM((c_out, scr_w), cdt)],
        compiler_params=pltpu.CompilerParams(
            dimension_semantics=("parallel",),
            vmem_limit_bytes=_vmem_limit_bytes(),
        ),
    )(*operands)
    return out.reshape(n, c_out, ho, wo)


# ---------------------------------------------------------------------------
# Pure-JAX reference (eval-mode BN) for the sanity checks.
# ---------------------------------------------------------------------------
def _ref_forward(x, params, *, stride=1, residual=True, residual_type="b"):
    dn = ("NCHW", "OIHW", "NCHW")
    hp = jax.lax.Precision.HIGHEST

    def bn(y, g, b, m, v):
        s = g * jax.lax.rsqrt(v + EPS)
        return y * s[None, :, None, None] + (b - m * s)[None, :, None, None]

    out = jax.lax.conv_general_dilated(x, params["w1"], (stride, stride),
                                       ((1, 1), (1, 1)), dimension_numbers=dn,
                                       precision=hp)
    out = bn(out, params["g1"], params["b1"], params["m1"], params["v1"])
    out = jnp.maximum(out, 0.0)
    out = jax.lax.conv_general_dilated(out, params["w2"], (1, 1),
                                       ((1, 1), (1, 1)), dimension_numbers=dn,
                                       precision=hp)
    out = bn(out, params["g2"], params["b2"], params["m2"], params["v2"])
    if residual:
        if x.shape == out.shape:
            res = x
        elif residual_type.lower() in ("b", "c"):
            res = jax.lax.conv_general_dilated(x, params["wp"], (stride, stride),
                                               ((0, 0), (0, 0)),
                                               dimension_numbers=dn, precision=hp)
            res = bn(res, params["gp"], params["bp"], params["mp"], params["vp"])
        else:
            d = x[:, :, ::stride, ::stride]
            res = jnp.concatenate([d, jnp.zeros_like(d)], axis=1)
        out = out + res
    return jnp.maximum(out, 0.0)


if __name__ == "__main__":
    key = jax.random.PRNGKey(0)
    ks = jax.random.split(key, 20)
    N, C_in, C_out, H, W, stride = 2, 4, 8, 16, 16, 2

    def bn_params(i):
        return (jax.random.uniform(ks[i], (C_out,), jnp.float32, 0.5, 1.5),
                jax.random.normal(ks[i + 1], (C_out,), jnp.float32) * 0.1,
                jax.random.normal(ks[i + 2], (C_out,), jnp.float32) * 0.1,
                jax.random.uniform(ks[i + 3], (C_out,), jnp.float32, 0.5, 1.5))

    x = jax.random.normal(ks[0], (N, C_in, H, W), jnp.float32)
    g1, b1, m1, v1 = bn_params(3)
    g2, b2, m2, v2 = bn_params(7)
    gp, bp, mp, vp = bn_params(11)
    params = dict(
        w1=jax.random.normal(ks[1], (C_out, C_in, 3, 3), jnp.float32) * 0.2,
        w2=jax.random.normal(ks[2], (C_out, C_out, 3, 3), jnp.float32) * 0.1,
        wp=jax.random.normal(ks[15], (C_out, C_in, 1, 1), jnp.float32) * 0.3,
        g1=g1, b1=b1, m1=m1, v1=v1,
        g2=g2, b2=b2, m2=m2, v2=v2,
        gp=gp, bp=bp, mp=mp, vp=vp,
    )

    # Config 1: DownsampleB projection shortcut (stride 2, C_in != C_out), bf16 compute.
    out = jax.block_until_ready(residual_block_forward(x, params, stride=stride))
    ref = _ref_forward(x, params, stride=stride)
    assert out.shape == (N, C_out, H // stride, W // stride)
    assert jnp.allclose(out, ref, atol=1e-1, rtol=1e-1), \
        float(jnp.max(jnp.abs(out - ref)))

    # Config 1b: same block, f32 compute -> tight structural check.
    out_f = jax.block_until_ready(
        residual_block_forward(x, params, stride=stride, compute_dtype=jnp.float32))
    assert jnp.allclose(out_f, ref, atol=2e-3, rtol=2e-3), \
        float(jnp.max(jnp.abs(out_f - ref)))

    # Config 2: identity shortcut (stride 1, C_in == C_out), bf16 + f32 checks.
    x2 = jax.random.normal(ks[16], (N, C_out, H // stride, W // stride), jnp.float32)
    params2 = dict(params, w1=params["w2"])
    ref2 = _ref_forward(x2, params2, stride=1)
    out2 = jax.block_until_ready(residual_block_forward(x2, params2, stride=1))
    assert out2.shape == x2.shape
    assert jnp.allclose(out2, ref2, atol=1e-1, rtol=1e-1), \
        float(jnp.max(jnp.abs(out2 - ref2)))
    out2_f = jax.block_until_ready(
        residual_block_forward(x2, params2, stride=1, compute_dtype=jnp.float32))
    assert jnp.allclose(out2_f, ref2, atol=2e-3, rtol=2e-3), \
        float(jnp.max(jnp.abs(out2_f - ref2)))

    # Config 3: DownsampleA zero-pad shortcut (residual_type='a', C_out == 2*C_in).
    out3 = jax.block_until_ready(
        residual_block_forward(x, params, stride=stride, residual_type="a"))
    ref3 = _ref_forward(x, params, stride=stride, residual_type="a")
    assert jnp.allclose(out3, ref3, atol=1e-1, rtol=1e-1), \
        float(jnp.max(jnp.abs(out3 - ref3)))

    print("KERNEL_OK")
</pallas_src>

<mosaic_0001>
module attributes {stable_mosaic.version = 11 : i64} {
  func.func @kernel(%arg0: i32, %arg1: memref<1x36x64xbf16, #tpu.memory_space<vmem>>, %arg2: memref<8x36xbf16, #tpu.memory_space<vmem>>, %arg3: memref<8x1xf32, #tpu.memory_space<vmem>>, %arg4: memref<9x8x8xbf16, #tpu.memory_space<vmem>>, %arg5: memref<8x1xf32, #tpu.memory_space<vmem>>, %arg6: memref<2x64xbf16, #tpu.memory_space<vmem>>, %arg7: memref<8x4xbf16, #tpu.memory_space<vmem>>, %arg8: memref<1x8x64xf32, #tpu.memory_space<vmem>>, %arg9: memref<8x201xbf16, #tpu.memory_space<vmem>>) attributes {dimension_semantics = [#tpu.dimension_semantics<parallel>], iteration_bounds = array<i64: 2>, scalar_prefetch = 0 : i64, scratch_operands = 1 : i64, tpu.core_type = #tpu.core_type<tc>, window_params = [{transform_indices = @transform_0, window_bounds = array<i64: 1, 36, 64>}, {pipeline_mode = #tpu.pipeline_mode<synchronous>, transform_indices = @transform_1, window_bounds = array<i64: 8, 36>}, {pipeline_mode = #tpu.pipeline_mode<synchronous>, transform_indices = @transform_2, window_bounds = array<i64: 8, 1>}, {pipeline_mode = #tpu.pipeline_mode<synchronous>, transform_indices = @transform_3, window_bounds = array<i64: 9, 8, 8>}, {pipeline_mode = #tpu.pipeline_mode<synchronous>, transform_indices = @transform_4, window_bounds = array<i64: 8, 1>}, {pipeline_mode = #tpu.pipeline_mode<synchronous>, transform_indices = @transform_5, window_bounds = array<i64: 2, 64>}, {pipeline_mode = #tpu.pipeline_mode<synchronous>, transform_indices = @transform_6, window_bounds = array<i64: 8, 4>}, {transform_indices = @transform_7, window_bounds = array<i64: 1, 8, 64>}]} {
    %c0 = arith.constant 0 : index
    %c0_0 = arith.constant 0 : index
    %0 = vector.load %arg6[%c0, %c0_0] : memref<2x64xbf16, #tpu.memory_space<vmem>>, vector<1x64xbf16>
    %c1 = arith.constant 1 : index
    %c0_1 = arith.constant 0 : index
    %1 = vector.load %arg6[%c1, %c0_1] : memref<2x64xbf16, #tpu.memory_space<vmem>>, vector<1x64xbf16>
    %c0_2 = arith.constant 0 : index
    %c0_3 = arith.constant 0 : index
    %2 = vector.load %arg2[%c0_2, %c0_3] : memref<8x36xbf16, #tpu.memory_space<vmem>>, vector<8x36xbf16>
    %c0_4 = arith.constant 0 : index
    %c0_5 = arith.constant 0 : index
    %c0_6 = arith.constant 0 : index
    %3 = vector.load %arg1[%c0_4, %c0_5, %c0_6] : memref<1x36x64xbf16, #tpu.memory_space<vmem>>, vector<1x36x64xbf16>
    %4 = vector.shape_cast %3 : vector<1x36x64xbf16> to vector<36x64xbf16>
    %cst = arith.constant dense<0.000000e+00> : vector<8x64xf32>
    %5 = tpu.matmul %2, %4, %cst {dimension_numbers = #tpu.dot_dimension_numbers<[1], [0], [0], [1], [0, 0, 1, 1], [], []>} : vector<8x36xbf16>, vector<36x64xbf16>, vector<8x64xf32> -> vector<8x64xf32>
    %c0_7 = arith.constant 0 : index
    %c0_8 = arith.constant 0 : index
    %6 = vector.load %arg3[%c0_7, %c0_8] : memref<8x1xf32, #tpu.memory_space<vmem>>, vector<8x1xf32>
    %7 = vector.broadcast %6 : vector<8x1xf32> to vector<8x64xf32>
    %8 = arith.addf %5, %7 : vector<8x64xf32>
    %cst_9 = arith.constant 0.000000e+00 : f32
    %9 = vector.broadcast %cst_9 : f32 to vector<8x64xf32>
    %10 = arith.maximumf %8, %9 : vector<8x64xf32>
    %11 = arith.truncf %10 : vector<8x64xf32> to vector<8x64xbf16>
    %cst_10 = arith.constant 0.000000e+00 : bf16
    %12 = vector.broadcast %cst_10 : bf16 to vector<8x201xbf16>
    %c0_11 = arith.constant 0 : index
    %c0_12 = arith.constant 0 : index
    %13 = vector.load %arg9[%c0_11, %c0_12] : memref<8x201xbf16, #tpu.memory_space<vmem>>, vector<8x201xbf16>
    tpu.vector_store %arg9[%c0_11, %c0_12], %12 {strides = array<i32>} : memref<8x201xbf16, #tpu.memory_space<vmem>>, vector<8x201xbf16>,
    %c0_13 = arith.constant 0 : index
    %c128 = arith.constant 128 : index
    %14 = vector.load %arg9[%c0_13, %c128] : memref<8x201xbf16, #tpu.memory_space<vmem>>, vector<8x64xbf16>
    tpu.vector_store %arg9[%c0_13, %c128], %11 {strides = array<i32>} : memref<8x201xbf16, #tpu.memory_space<vmem>>, vector<8x64xbf16>,
    %cst_14 = arith.constant 0.000000e+00 : f32
    %15 = vector.broadcast %cst_14 : f32 to vector<8x64xf32>
    %c0_15 = arith.constant 0 : index
    %c119 = arith.constant 119 : index
    %16 = vector.load %arg9[%c0_15, %c119] : memref<8x201xbf16, #tpu.memory_space<vmem>>, vector<8x64xbf16>
    %17 = vector.broadcast %0 : vector<1x64xbf16> to vector<8x64xbf16>
    %18 = arith.mulf %16, %17 : vector<8x64xbf16>
    %c0_16 = arith.constant 0 : index
    %c0_17 = arith.constant 0 : index
    %c0_18 = arith.constant 0 : index
    %19 = vector.load %arg4[%c0_16, %c0_17, %c0_18] : memref<9x8x8xbf16, #tpu.memory_space<vmem>>, vector<1x8x8xbf16>
    %20 = vector.shape_cast %19 : vector<1x8x8xbf16> to vector<8x8xbf16>
    %cst_19 = arith.constant dense<0.000000e+00> : vector<8x64xf32>
    %21 = tpu.matmul %20, %18, %cst_19 {dimension_numbers = #tpu.dot_dimension_numbers<[1], [0], [0], [1], [0, 0, 1, 1], [], []>} : vector<8x8xbf16>, vector<8x64xbf16>, vector<8x64xf32> -> vector<8x64xf32>
    %22 = arith.addf %15, %21 : vector<8x64xf32>
    %c0_20 = arith.constant 0 : index
    %c120 = arith.constant 120 : index
    %23 = vector.load %arg9[%c0_20, %c120] : memref<8x201xbf16, #tpu.memory_space<vmem>>, vector<8x64xbf16>
    %c1_21 = arith.constant 1 : index
    %c0_22 = arith.constant 0 : index
    %c0_23 = arith.constant 0 : index
    %24 = vector.load %arg4[%c1_21, %c0_22, %c0_23] : memref<9x8x8xbf16, #tpu.memory_space<vmem>>, vector<1x8x8xbf16>
    %25 = vector.shape_cast %24 : vector<1x8x8xbf16> to vector<8x8xbf16>
    %cst_24 = arith.constant dense<0.000000e+00> : vector<8x64xf32>
    %26 = tpu.matmul %25, %23, %cst_24 {dimension_numbers = #tpu.dot_dimension_numbers<[1], [0], [0], [1], [0, 0, 1, 1], [], []>} : vector<8x8xbf16>, vector<8x64xbf16>, vector<8x64xf32> -> vector<8x64xf32>
    %27 = arith.addf %22, %26 : vector<8x64xf32>
    %c0_25 = arith.constant 0 : index
    %c121 = arith.constant 121 : index
    %28 = vector.load %arg9[%c0_25, %c121] : memref<8x201xbf16, #tpu.memory_space<vmem>>, vector<8x64xbf16>
    %29 = vector.broadcast %1 : vector<1x64xbf16> to vector<8x64xbf16>
    %30 = arith.mulf %28, %29 : vector<8x64xbf16>
    %c2 = arith.constant 2 : index
    %c0_26 = arith.constant 0 : index
    %c0_27 = arith.constant 0 : index
    %31 = vector.load %arg4[%c2, %c0_26, %c0_27] : memref<9x8x8xbf16, #tpu.memory_space<vmem>>, vector<1x8x8xbf16>
    %32 = vector.shape_cast %31 : vector<1x8x8xbf16> to vector<8x8xbf16>
    %cst_28 = arith.constant dense<0.000000e+00> : vector<8x64xf32>
    %33 = tpu.matmul %32, %30, %cst_28 {dimension_numbers = #tpu.dot_dimension_numbers<[1], [0], [0], [1], [0, 0, 1, 1], [], []>} : vector<8x8xbf16>, vector<8x64xbf16>, vector<8x64xf32> -> vector<8x64xf32>
    %34 = arith.addf %27, %33 : vector<8x64xf32>
    %c0_29 = arith.constant 0 : index
    %c127 = arith.constant 127 : index
    %35 = vector.load %arg9[%c0_29, %c127] : memref<8x201xbf16, #tpu.memory_space<vmem>>, vector<8x64xbf16>
    %36 = vector.broadcast %0 : vector<1x64xbf16> to vector<8x64xbf16>
    %37 = arith.mulf %35, %36 : vector<8x64xbf16>
    %c3 = arith.constant 3 : index
    %c0_30 = arith.constant 0 : index
    %c0_31 = arith.constant 0 : index
    %38 = vector.load %arg4[%c3, %c0_30, %c0_31] : memref<9x8x8xbf16, #tpu.memory_space<vmem>>, vector<1x8x8xbf16>
    %39 = vector.shape_cast %38 : vector<1x8x8xbf16> to vector<8x8xbf16>
    %cst_32 = arith.constant dense<0.000000e+00> : vector<8x64xf32>
    %40 = tpu.matmul %39, %37, %cst_32 {dimension_numbers = #tpu.dot_dimension_numbers<[1], [0], [0], [1], [0, 0, 1, 1], [], []>} : vector<8x8xbf16>, vector<8x64xbf16>, vector<8x64xf32> -> vector<8x64xf32>
    %41 = arith.addf %34, %40 : vector<8x64xf32>
    %c0_33 = arith.constant 0 : index
    %c128_34 = arith.constant 128 : index
    %42 = vector.load %arg9[%c0_33, %c128_34] : memref<8x201xbf16, #tpu.memory_space<vmem>>, vector<8x64xbf16>
    %c4 = arith.constant 4 : index
    %c0_35 = arith.constant 0 : index
    %c0_36 = arith.constant 0 : index
    %43 = vector.load %arg4[%c4, %c0_35, %c0_36] : memref<9x8x8xbf16, #tpu.memory_space<vmem>>, vector<1x8x8xbf16>
    %44 = vector.shape_cast %43 : vector<1x8x8xbf16> to vector<8x8xbf16>
    %cst_37 = arith.constant dense<0.000000e+00> : vector<8x64xf32>
    %45 = tpu.matmul %44, %42, %cst_37 {dimension_numbers = #tpu.dot_dimension_numbers<[1], [0], [0], [1], [0, 0, 1, 1], [], []>} : vector<8x8xbf16>, vector<8x64xbf16>, vector<8x64xf32> -> vector<8x64xf32>
    %46 = arith.addf %41, %45 : vector<8x64xf32>
    %c0_38 = arith.constant 0 : index
    %c129 = arith.constant 129 : index
    %47 = vector.load %arg9[%c0_38, %c129] : memref<8x201xbf16, #tpu.memory_space<vmem>>, vector<8x64xbf16>
    %48 = vector.broadcast %1 : vector<1x64xbf16> to vector<8x64xbf16>
    %49 = arith.mulf %47, %48 : vector<8x64xbf16>
    %c5 = arith.constant 5 : index
    %c0_39 = arith.constant 0 : index
    %c0_40 = arith.constant 0 : index
    %50 = vector.load %arg4[%c5, %c0_39, %c0_40] : memref<9x8x8xbf16, #tpu.memory_space<vmem>>, vector<1x8x8xbf16>
    %51 = vector.shape_cast %50 : vector<1x8x8xbf16> to vector<8x8xbf16>
    %cst_41 = arith.constant dense<0.000000e+00> : vector<8x64xf32>
    %52 = tpu.matmul %51, %49, %cst_41 {dimension_numbers = #tpu.dot_dimension_numbers<[1], [0], [0], [1], [0, 0, 1, 1], [], []>} : vector<8x8xbf16>, vector<8x64xbf16>, vector<8x64xf32> -> vector<8x64xf32>
    %53 = arith.addf %46, %52 : vector<8x64xf32>
    %c0_42 = arith.constant 0 : index
    %c135 = arith.constant 135 : index
    %54 = vector.load %arg9[%c0_42, %c135] : memref<8x201xbf16, #tpu.memory_space<vmem>>, vector<8x64xbf16>
    %55 = vector.broadcast %0 : vector<1x64xbf16> to vector<8x64xbf16>
    %56 = arith.mulf %54, %55 : vector<8x64xbf16>
    %c6 = arith.constant 6 : index
    %c0_43 = arith.constant 0 : index
    %c0_44 = arith.constant 0 : index
    %57 = vector.load %arg4[%c6, %c0_43, %c0_44] : memref<9x8x8xbf16, #tpu.memory_space<vmem>>, vector<1x8x8xbf16>
    %58 = vector.shape_cast %57 : vector<1x8x8xbf16> to vector<8x8xbf16>
    %cst_45 = arith.constant dense<0.000000e+00> : vector<8x64xf32>
    %59 = tpu.matmul %58, %56, %cst_45 {dimension_numbers = #tpu.dot_dimension_numbers<[1], [0], [0], [1], [0, 0, 1, 1], [], []>} : vector<8x8xbf16>, vector<8x64xbf16>, vector<8x64xf32> -> vector<8x64xf32>
    %60 = arith.addf %53, %59 : vector<8x64xf32>
    %c0_46 = arith.constant 0 : index
    %c136 = arith.constant 136 : index
    %61 = vector.load %arg9[%c0_46, %c136] : memref<8x201xbf16, #tpu.memory_space<vmem>>, vector<8x64xbf16>
    %c7 = arith.constant 7 : index
    %c0_47 = arith.constant 0 : index
    %c0_48 = arith.constant 0 : index
    %62 = vector.load %arg4[%c7, %c0_47, %c0_48] : memref<9x8x8xbf16, #tpu.memory_space<vmem>>, vector<1x8x8xbf16>
    %63 = vector.shape_cast %62 : vector<1x8x8xbf16> to vector<8x8xbf16>
    %cst_49 = arith.constant dense<0.000000e+00> : vector<8x64xf32>
    %64 = tpu.matmul %63, %61, %cst_49 {dimension_numbers = #tpu.dot_dimension_numbers<[1], [0], [0], [1], [0, 0, 1, 1], [], []>} : vector<8x8xbf16>, vector<8x64xbf16>, vector<8x64xf32> -> vector<8x64xf32>
    %65 = arith.addf %60, %64 : vector<8x64xf32>
    %c0_50 = arith.constant 0 : index
    %c137 = arith.constant 137 : index
    %66 = vector.load %arg9[%c0_50, %c137] : memref<8x201xbf16, #tpu.memory_space<vmem>>, vector<8x64xbf16>
    %67 = vector.broadcast %1 : vector<1x64xbf16> to vector<8x64xbf16>
    %68 = arith.mulf %66, %67 : vector<8x64xbf16>
    %c8 = arith.constant 8 : index
    %c0_51 = arith.constant 0 : index
    %c0_52 = arith.constant 0 : index
    %69 = vector.load %arg4[%c8, %c0_51, %c0_52] : memref<9x8x8xbf16, #tpu.memory_space<vmem>>, vector<1x8x8xbf16>
    %70 = vector.shape_cast %69 : vector<1x8x8xbf16> to vector<8x8xbf16>
    %cst_53 = arith.constant dense<0.000000e+00> : vector<8x64xf32>
    %71 = tpu.matmul %70, %68, %cst_53 {dimension_numbers = #tpu.dot_dimension_numbers<[1], [0], [0], [1], [0, 0, 1, 1], [], []>} : vector<8x8xbf16>, vector<8x64xbf16>, vector<8x64xf32> -> vector<8x64xf32>
    %72 = arith.addf %65, %71 : vector<8x64xf32>
    %c0_54 = arith.constant 0 : index
    %c0_55 = arith.constant 0 : index
    %73 = vector.load %arg5[%c0_54, %c0_55] : memref<8x1xf32, #tpu.memory_space<vmem>>, vector<8x1xf32>
    %74 = vector.broadcast %73 : vector<8x1xf32> to vector<8x64xf32>
    %75 = arith.addf %72, %74 : vector<8x64xf32>
    %c0_56 = arith.constant 0 : index
    %c16 = arith.constant 16 : index
    %c0_57 = arith.constant 0 : index
    %76 = vector.load %arg1[%c0_56, %c16, %c0_57] : memref<1x36x64xbf16, #tpu.memory_space<vmem>>, vector<1x4x64xbf16>
    %77 = vector.shape_cast %76 : vector<1x4x64xbf16> to vector<4x64xbf16>
    %c0_58 = arith.constant 0 : index
    %c0_59 = arith.constant 0 : index
    %78 = vector.load %arg7[%c0_58, %c0_59] : memref<8x4xbf16, #tpu.memory_space<vmem>>, vector<8x4xbf16>
    %cst_60 = arith.constant dense<0.000000e+00> : vector<8x64xf32>
    %79 = tpu.matmul %78, %77, %cst_60 {dimension_numbers = #tpu.dot_dimension_numbers<[1], [0], [0], [1], [0, 0, 1, 1], [], []>} : vector<8x4xbf16>, vector<4x64xbf16>, vector<8x64xf32> -> vector<8x64xf32>
    %80 = arith.addf %75, %79 : vector<8x64xf32>
    %cst_61 = arith.constant 0.000000e+00 : f32
    %81 = vector.broadcast %cst_61 : f32 to vector<8x64xf32>
    %82 = arith.maximumf %80, %81 : vector<8x64xf32>
    %c0_62 = arith.constant 0 : index
    %c0_63 = arith.constant 0 : index
    %c0_64 = arith.constant 0 : index
    %83 = vector.load %arg8[%c0_62, %c0_63, %c0_64] : memref<1x8x64xf32, #tpu.memory_space<vmem>>, vector<1x8x64xf32>
    %84 = vector.shape_cast %83 : vector<1x8x64xf32> to vector<8x64xf32>
    %85 = vector.shape_cast %82 : vector<8x64xf32> to vector<1x8x64xf32>
    tpu.vector_store %arg8[%c0_62, %c0_63, %c0_64], %85 {strides = array<i32>} : memref<1x8x64xf32, #tpu.memory_space<vmem>>, vector<1x8x64xf32>,
    return
  }
  func.func @transform_0(%arg0: i32) -> (i32, i32, i32) {
    %c0_i32 = arith.constant 0 : i32
    %c0_i32_0 = arith.constant 0 : i32
    %c0_i32_1 = arith.constant 0 : i32
    return %arg0, %c0_i32, %c0_i32_0 : i32, i32, i32
  }
  func.func @transform_1(%arg0: i32) -> (i32, i32) {
    %c0_i32 = arith.constant 0 : i32
    %c0_i32_0 = arith.constant 0 : i32
    %c0_i32_1 = arith.constant 0 : i32
    return %c0_i32, %c0_i32_0 : i32, i32
  }
  func.func @transform_2(%arg0: i32) -> (i32, i32) {
    %c0_i32 = arith.constant 0 : i32
    %c0_i32_0 = arith.constant 0 : i32
    %c0_i32_1 = arith.constant 0 : i32
    return %c0_i32, %c0_i32_0 : i32, i32
  }
  func.func @transform_3(%arg0: i32) -> (i32, i32, i32) {
    %c0_i32 = arith.constant 0 : i32
    %c0_i32_0 = arith.constant 0 : i32
    %c0_i32_1 = arith.constant 0 : i32
    %c0_i32_2 = arith.constant 0 : i32
    return %c0_i32, %c0_i32_0, %c0_i32_1 : i32, i32, i32
  }
  func.func @transform_4(%arg0: i32) -> (i32, i32) {
    %c0_i32 = arith.constant 0 : i32
    %c0_i32_0 = arith.constant 0 : i32
    %c0_i32_1 = arith.constant 0 : i32
    return %c0_i32, %c0_i32_0 : i32, i32
  }
  func.func @transform_5(%arg0: i32) -> (i32, i32) {
    %c0_i32 = arith.constant 0 : i32
    %c0_i32_0 = arith.constant 0 : i32
    %c0_i32_1 = arith.constant 0 : i32
    return %c0_i32, %c0_i32_0 : i32, i32
  }
  func.func @transform_6(%arg0: i32) -> (i32, i32) {
    %c0_i32 = arith.constant 0 : i32
    %c0_i32_0 = arith.constant 0 : i32
    %c0_i32_1 = arith.constant 0 : i32
    return %c0_i32, %c0_i32_0 : i32, i32
  }
  func.func @transform_7(%arg0: i32) -> (i32, i32, i32) {
    %c0_i32 = arith.constant 0 : i32
    %c0_i32_0 = arith.constant 0 : i32
    %c0_i32_1 = arith.constant 0 : i32
    return %arg0, %c0_i32, %c0_i32_0 : i32, i32, i32
  }
}

</mosaic_0001>

<llo_original>
// kernel: tpu_custom_call.1
$region0: #{tpu_custom_call.1}
  #allocation0 [shape = 'u32[]', space=smem, size = 0x4, offset = 0x4, fixed_abs, tag = 'smem constant byte address 0x4 - core index']
  #allocation1 [shape = 'u32[144,128]{1,0:T(1,128)}', space=vmem, size = 0x12000, scoped, tag = 'internal scratch']
  #allocation2 [shape = 'bf16[8,201]{1,0:T(8,128)(2,1)}', space=vmem, size = 0x1000, scoped, tag = 'scratch operand']
  %s0 = inlined_call_operand.vmem [shape: bf16[2,36,64], index: 0, kind: input, shape index: {}]
  %s1 = inlined_call_operand.vmem [shape: bf16[8,36], index: 1, kind: input, shape index: {}]
  %s2 = inlined_call_operand.vmem [shape: f32[8,1], index: 2, kind: input, shape index: {}]
  %s3 = inlined_call_operand.vmem [shape: bf16[9,8,8], index: 3, kind: input, shape index: {}]
  %s4 = inlined_call_operand.vmem [shape: f32[8,1], index: 4, kind: input, shape index: {}]
  %s5 = inlined_call_operand.vmem [shape: bf16[2,64], index: 5, kind: input, shape index: {}]
  %s6 = inlined_call_operand.vmem [shape: bf16[8,4], index: 6, kind: input, shape index: {}]
  %s7 = inlined_call_operand.hbm [shape: f32[2,8,64], index: 7, kind: output, shape index: {}]
  %s8 = sld [smem:[#allocation0]]
  $region61: #{tpu_custom_call.1} parent=0
    _
  %s10 = ssub.s32 1, %s8
  %s11 = scalar_select 0, %s10, %s8
  $region1: #{tpu_custom_call.1} parent=0
    #allocation3 [shape = 'u8[8192]{0}', space=vmem, size = 0x2000, scoped, tag = 'output window, operand 0']
    #allocation4 [shape = 's32[2]{0}', space=sflag, size = 0x8, scoped, tag = 'scoped memory for tpu_custom_call.1']
    %12 = vsyncpa [#allocation4], 0
    %s13 = scalar_lea.sflag [#allocation4], 1
    %14 = vsyncpa %s13, 0
    loop: start=0, step=1, limit=4
    $region2: #{tpu_custom_call.1} parent=1 // loop_pre_header
      _
    $region3: #{tpu_custom_call.1} parent=1 // loop_header
      %s16 = sphi 0, %s20
      %p17 = scmp.ge.s32.totalorder %s16, 4
      %s26 = sphi 0, %s28
      %s29 = sphi 0, %s26
      %s30 = sphi 0, %s29
      %s46 = sphi 0, %s30
      %s50 = sphi 0, %s50
      %s52 = sphi 0, %s50
      %s53 = sphi 0, %s52
      %s67 = sphi 0, %s53
      %s71 = sphi 0, %s71
      %s73 = sphi 0, %s71
      %s74 = sphi 0, %s73
      %s88 = sphi 0, %s74
      %s92 = sphi 0, %s92
      %s94 = sphi 0, %s92
      %s95 = sphi 0, %s94
      %s109 = sphi 0, %s95
      %s113 = sphi 0, %s113
      %s115 = sphi 0, %s113
      %s116 = sphi 0, %s115
      %s130 = sphi 0, %s116
      %s134 = sphi 0, %s134
      %s136 = sphi 0, %s134
      %s137 = sphi 0, %s136
      %s151 = sphi 0, %s137
      %s155 = sphi 0, %s155
      %s157 = sphi 0, %s155
      %s158 = sphi 0, %s157
      %s172 = sphi 0, %s158
      %s178 = sphi 0, %s180
      %s181 = sphi 0, %s178
      %s182 = sphi 0, %s181
      %s198 = sphi 0, %s182
    $region4: #{tpu_custom_call.1} parent=1 // loop_header_branch
      %19 = sbr.rel (%p17) target = $region8
    $region5: #{tpu_custom_call.1} parent=1 // loop_body
      %s21 = ssub.s32 %s16, 1
      %s22 = ssub.s32 %s16, 2
      %s23 = sadd.s32 %s16, 1
      %s24 = ssub.s32 %s16, %s23
      %p25 = scmp.eq.s32.totalorder %s24, 0
      %s27 = sadd.s32 %s26, 1
      %s28 = scalar_select %p25, %s26, %s27
      %p31 = pneg %p25
      %p32 = scmp.eq.s32.totalorder %s16, 1
      %p33 = por %p31, %p32
      %p34 = scmp.ne.s32.totalorder %s26, %s29
      %p35 = scmp.eq.s32.totalorder %s16, 0
      %p36 = por %p34, %p35
      %p37 = scmp.ne.s32.totalorder %s26, %s29
      %p38 = scmp.eq.s32.totalorder %s21, 1
      %p39 = por %p37, %p38
      %p40 = scmp.ne.s32.totalorder %s29, %s30
      %p41 = scmp.eq.s32.totalorder %s21, 0
      %p42 = por %p40, %p41
      %p43 = scmp.ne.s32.totalorder %s29, %s30
      %p44 = scmp.eq.s32.totalorder %s22, 1
      %p45 = por %p43, %p44
      %p47 = scmp.ne.s32.totalorder %s30, %s46
      %p48 = scmp.eq.s32.totalorder %s22, 0
      %p49 = por %p47, %p48
      %s51 = sadd.s32 %s50, 1
      %p54 = scmp.eq.s32.totalorder %s16, 1
      %p55 = scmp.ne.s32.totalorder %s50, %s52
      %p56 = scmp.eq.s32.totalorder %s16, 0
      %p57 = por %p55, %p56
      %p58 = scmp.ne.s32.totalorder %s50, %s52
      %p59 = scmp.eq.s32.totalorder %s21, 1
      %p60 = por %p58, %p59
      %p61 = scmp.ne.s32.totalorder %s52, %s53
      %p62 = scmp.eq.s32.totalorder %s21, 0
      %p63 = por %p61, %p62
      %p64 = scmp.ne.s32.totalorder %s52, %s53
      %p65 = scmp.eq.s32.totalorder %s22, 1
      %p66 = por %p64, %p65
      %p68 = scmp.ne.s32.totalorder %s53, %s67
      %p69 = scmp.eq.s32.totalorder %s22, 0
      %p70 = por %p68, %p69
      %s72 = sadd.s32 %s71, 1
      %p75 = scmp.eq.s32.totalorder %s16, 1
      %p76 = scmp.ne.s32.totalorder %s71, %s73
      %p77 = scmp.eq.s32.totalorder %s16, 0
      %p78 = por %p76, %p77
      %p79 = scmp.ne.s32.totalorder %s71, %s73
      %p80 = scmp.eq.s32.totalorder %s21, 1
      %p81 = por %p79, %p80
      %p82 = scmp.ne.s32.totalorder %s73, %s74
      %p83 = scmp.eq.s32.totalorder %s21, 0
      %p84 = por %p82, %p83
      %p85 = scmp.ne.s32.totalorder %s73, %s74
      %p86 = scmp.eq.s32.totalorder %s22, 1
      %p87 = por %p85, %p86
      %p89 = scmp.ne.s32.totalorder %s74, %s88
      %p90 = scmp.eq.s32.totalorder %s22, 0
      %p91 = por %p89, %p90
      %s93 = sadd.s32 %s92, 1
      %p96 = scmp.eq.s32.totalorder %s16, 1
      %p97 = scmp.ne.s32.totalorder %s92, %s94
      %p98 = scmp.eq.s32.totalorder %s16, 0
      %p99 = por %p97, %p98
      %p100 = scmp.ne.s32.totalorder %s92, %s94
      %p101 = scmp.eq.s32.totalorder %s21, 1
      %p102 = por %p100, %p101
      %p103 = scmp.ne.s32.totalorder %s94, %s95
      %p104 = scmp.eq.s32.totalorder %s21, 0
      %p105 = por %p103, %p104
      %p106 = scmp.ne.s32.totalorder %s94, %s95
      %p107 = scmp.eq.s32.totalorder %s22, 1
      %p108 = por %p106, %p107
      %p110 = scmp.ne.s32.totalorder %s95, %s109
      %p111 = scmp.eq.s32.totalorder %s22, 0
      %p112 = por %p110, %p111
      %s114 = sadd.s32 %s113, 1
      %p117 = scmp.eq.s32.totalorder %s16, 1
      %p118 = scmp.ne.s32.totalorder %s113, %s115
      %p119 = scmp.eq.s32.totalorder %s16, 0
      %p120 = por %p118, %p119
      %p121 = scmp.ne.s32.totalorder %s113, %s115
      %p122 = scmp.eq.s32.totalorder %s21, 1
      %p123 = por %p121, %p122
      %p124 = scmp.ne.s32.totalorder %s115, %s116
      %p125 = scmp.eq.s32.totalorder %s21, 0
      %p126 = por %p124, %p125
      %p127 = scmp.ne.s32.totalorder %s115, %s116
      %p128 = scmp.eq.s32.totalorder %s22, 1
      %p129 = por %p127, %p128
      %p131 = scmp.ne.s32.totalorder %s116, %s130
      %p132 = scmp.eq.s32.totalorder %s22, 0
      %p133 = por %p131, %p132
      %s135 = sadd.s32 %s134, 1
      %p138 = scmp.eq.s32.totalorder %s16, 1
      %p139 = scmp.ne.s32.totalorder %s134, %s136
      %p140 = scmp.eq.s32.totalorder %s16, 0
      %p141 = por %p139, %p140
      %p142 = scmp.ne.s32.totalorder %s134, %s136
      %p143 = scmp.eq.s32.totalorder %s21, 1
      %p144 = por %p142, %p143
      %p145 = scmp.ne.s32.totalorder %s136, %s137
      %p146 = scmp.eq.s32.totalorder %s21, 0
      %p147 = por %p145, %p146
      %p148 = scmp.ne.s32.totalorder %s136, %s137
      %p149 = scmp.eq.s32.totalorder %s22, 1
      %p150 = por %p148, %p149
      %p152 = scmp.ne.s32.totalorder %s137, %s151
      %p153 = scmp.eq.s32.totalorder %s22, 0
      %p154 = por %p152, %p153
      %s156 = sadd.s32 %s155, 1
      %p159 = scmp.eq.s32.totalorder %s16, 1
      %p160 = scmp.ne.s32.totalorder %s155, %s157
      %p161 = scmp.eq.s32.totalorder %s16, 0
      %p162 = por %p160, %p161
      %p163 = scmp.ne.s32.totalorder %s155, %s157
      %p164 = scmp.eq.s32.totalorder %s21, 1
      %p165 = por %p163, %p164
      %p166 = scmp.ne.s32.totalorder %s157, %s158
      %p167 = scmp.eq.s32.totalorder %s21, 0
      %p168 = por %p166, %p167
      %p169 = scmp.ne.s32.totalorder %s157, %s158
      %p170 = scmp.eq.s32.totalorder %s22, 1
      %p171 = por %p169, %p170
      %p173 = scmp.ne.s32.totalorder %s158, %s172
      %p174 = scmp.eq.s32.totalorder %s22, 0
      %p175 = por %p173, %p174
      %s176 = ssub.s32 %s16, %s23
      %p177 = scmp.eq.s32.totalorder %s176, 0
      %s179 = sadd.s32 %s178, 1
      %s180 = scalar_select %p177, %s178, %s179
      %p183 = pneg %p177
      %p184 = scmp.eq.s32.totalorder %s16, 1
      %p185 = por %p183, %p184
      %p186 = scmp.ne.s32.totalorder %s178, %s181
      %p187 = scmp.eq.s32.totalorder %s16, 0
      %p188 = por %p186, %p187
      %p189 = scmp.ne.s32.totalorder %s178, %s181
      %p190 = scmp.eq.s32.totalorder %s21, 1
      %p191 = por %p189, %p190
      %p192 = scmp.ne.s32.totalorder %s181, %s182
      %p193 = scmp.eq.s32.totalorder %s21, 0
      %p194 = por %p192, %p193
      %p195 = scmp.ne.s32.totalorder %s181, %s182
      %p196 = scmp.eq.s32.totalorder %s22, 1
      %p197 = por %p195, %p196
      %p199 = scmp.ne.s32.totalorder %s182, %s198
      %p200 = scmp.eq.s32.totalorder %s22, 0
      %p201 = por %p199, %p200
      %p202 = scmp.le.s32.totalorder 1, %s16
      %p203 = scmp.lt.s32.totalorder %s16, 3
      %p204 = pnand %p202, %p203
      %p205 = pneg %p204
      // Predicated region
      $region9: #{tpu_custom_call.1} parent=5 // pred_check
        _
      $region10: #{tpu_custom_call.1} parent=5 // pred_check_branch
        %207 = sbr.rel (%p204) target = $region12
      $region11: #{tpu_custom_call.1} parent=5 // pred_region
        %s208 = ssub.s32 %s16, 1
        // Predicated region
        $region13: #{tpu_custom_call.1} parent=11 // pred_check
          %p209 = pneg %p63
        $region14: #{tpu_custom_call.1} parent=11 // pred_check_branch
          %211 = sbr.rel (%p209) target = $region16
        $region15: #{tpu_custom_call.1} parent=11 // pred_region
          _
        $region16: #{tpu_custom_call.1} parent=11 // pred_fallthru
          _
        // Predicated region
        $region17: #{tpu_custom_call.1} parent=11 // pred_check
          %p212 = pneg %p84
        $region18: #{tpu_custom_call.1} parent=11 // pred_check_branch
          %214 = sbr.rel (%p212) target = $region20
        $region19: #{tpu_custom_call.1} parent=11 // pred_region
          _
        $region20: #{tpu_custom_call.1} parent=11 // pred_fallthru
          _
        // Predicated region
        $region21: #{tpu_custom_call.1} parent=11 // pred_check
          %p215 = pneg %p105
        $region22: #{tpu_custom_call.1} parent=11 // pred_check_branch
          %217 = sbr.rel (%p215) target = $region24
        $region23: #{tpu_custom_call.1} parent=11 // pred_region
          _
        $region24: #{tpu_custom_call.1} parent=11 // pred_fallthru
          _
        // Predicated region
        $region25: #{tpu_custom_call.1} parent=11 // pred_check
          %p218 = pneg %p126
        $region26: #{tpu_custom_call.1} parent=11 // pred_check_branch
          %220 = sbr.rel (%p218) target = $region28
        $region27: #{tpu_custom_call.1} parent=11 // pred_region
          _
        $region28: #{tpu_custom_call.1} parent=11 // pred_fallthru
          _
        // Predicated region
        $region29: #{tpu_custom_call.1} parent=11 // pred_check
          %p221 = pneg %p147
        $region30: #{tpu_custom_call.1} parent=11 // pred_check_branch
          %223 = sbr.rel (%p221) target = $region32
        $region31: #{tpu_custom_call.1} parent=11 // pred_region
          _
        $region32: #{tpu_custom_call.1} parent=11 // pred_fallthru
          _
        // Predicated region
        $region33: #{tpu_custom_call.1} parent=11 // pred_check
          %p224 = pneg %p168
        $region34: #{tpu_custom_call.1} parent=11 // pred_check_branch
          %226 = sbr.rel (%p224) target = $region36
        $region35: #{tpu_custom_call.1} parent=11 // pred_region
          _
        $region36: #{tpu_custom_call.1} parent=11 // pred_fallthru
          _
      $region12: #{tpu_custom_call.1} parent=5 // pred_fallthru
        _
      %p227 = scmp.lt.s32.totalorder %s16, 2
      // Predicated region
      $region37: #{tpu_custom_call.1} parent=5 // pred_check
        %p228 = pneg %p227
      $region38: #{tpu_custom_call.1} parent=5 // pred_check_branch
        %230 = sbr.rel (%p228) target = $region40
      $region39: #{tpu_custom_call.1} parent=5 // pred_region
        // Predicated region
        $region41: #{tpu_custom_call.1} parent=39 // pred_check
          %p231 = pneg %p36
        $region42: #{tpu_custom_call.1} parent=39 // pred_check_branch
          %233 = sbr.rel (%p231) target = $region44
        $region43: #{tpu_custom_call.1} parent=39 // pred_region
          %p234 = scmp.lt.s32.totalorder %s16, 1
          %s235 = scalar_select %p234, %s16, 1
          %s236 = smul.addr %s235, 5
          %s237 = smul.addr %s236, 4
          %s238 = scalar_lea.vmem %s0, %s237
        $region44: #{tpu_custom_call.1} parent=39 // pred_fallthru
          _
      $region40: #{tpu_custom_call.1} parent=5 // pred_fallthru
        _
      %p239 = scmp.le.s32.totalorder 1, %s16
      %p240 = scmp.lt.s32.totalorder %s16, 3
      %p241 = pnand %p239, %p240
      %p242 = pneg %p241
      // Predicated region
      $region45: #{tpu_custom_call.1} parent=5 // pred_check
        _
      $region46: #{tpu_custom_call.1} parent=5 // pred_check_branch
        %244 = sbr.rel (%p241) target = $region48
      $region47: #{tpu_custom_call.1} parent=5 // pred_region
        %s245 = ssub.s32 %s16, 1
        %p246 = scmp.lt.s32.totalorder %s21, 1
        %s247 = scalar_select %p246, %s21, 1
        %s248 = smul.addr %s247, 5
        %s249 = smul.addr %s248, 4
        %s250 = scalar_lea.vmem %s0, %s249
        %p251 = pneg %p42
        %p252 = pneg %p39
        %p253 = pneg %p63
        %p254 = pneg %p60
        %p255 = pneg %p84
        %p256 = pneg %p81
        %p257 = pneg %p105
        %p258 = pneg %p102
        %p259 = pneg %p126
        %p260 = pneg %p123
        %p261 = pneg %p147
        %p262 = pneg %p144
        %p263 = pneg %p168
        %p264 = pneg %p165
        %p265 = pneg %p194
        %p266 = pneg %p191
        %s267 = sand.u32 %s181, 1
        %s268 = scalar_lea.sflag [#allocation4], %s267
        %s269 = sand.u32 %s181, 1
        %s270 = smul.addr %s269, 8
        %s271 = scalar_lea.vmem [#allocation3], %s270
        %p272 = scmp.lt.s32.totalorder %s21, 1
        %s273 = scalar_select %p272, %s21, 1
        %s274 = smul.addr %s273, 5
        %s275 = smul.addr %s274, 4
        %s276 = scalar_lea.vmem %s0, %s275
        %v278 = vld [vmem:[%s5] sm:$0x1]
        %v279 = vld [vmem:[%s1] sm:$0xf]
        %v280 = vld [vmem:[%s276] sm:$0xf]
        %v281 = vld [vmem:[%s276 + $0x4] sm:$0xf]
        %v282 = vld [vmem:[%s276 + $0x8] sm:$0xf]
        %v283 = vld [vmem:[%s276 + $0xc] sm:$0xf]
        %v284 = vld [vmem:[%s276 + $0x10] sm:$0x3]
        %v285 = vld [vmem:[%s2] sm:$0xff]
        %287 = vset.pattern.permute.xlu0 0
        %288 = vperm.xlu0 %287, %v285
        %v289 = vpop.permute.xlu0 %288
        %v296 = vunpack.c.l.b16 %v280
        %v297 = vunpack.c.l.b16 %v281
        %v298 = vunpack.c.l.b16 %v282
        %v299 = vunpack.c.l.b16 %v283
        %v300 = vunpack.c.l.b16 %v284
        %v301 = vpack.c.b16 %v297, %v296
        %v302 = vpack.c.b16 %v299, %v298
        %v303 = vpack.c.b16 %v300, %v300
        %vm306 = vcmask 293888
        %v308 = vsel %vm306, %v279, 0
        %vm310 = vcmask 1041408
        %v312 = vsel %vm310, %v303, 0
        %314 = vmatprep.subr.bf16.mxu0 0
        %315 = vmatpush1.bf16.msra.mxu0 %v301
        %316 = vmatprep.subr.bf16.mxu0 0
        %317 = vmatpush1.bf16.msra.mxu0 %v302
        %318 = vmatprep.subr.bf16.mxu0 0
        %319 = vmatpush1.bf16.msra.mxu0 %v312
        %320 = vmatprep.subr.bf16.mxu0 0
        %321 = vmatpush1.bf16.msra.mxu0 0
        %322 = vmatprep.subr.bf16.mxu0 0
        %323 = vmatpush1.bf16.msra.mxu0 0
        %324 = vmatprep.subr.bf16.mxu0 0
        %325 = vmatpush1.bf16.msra.mxu0 0
        %326 = vmatprep.subr.bf16.mxu0 0
        %327 = vmatpush1.bf16.msra.mxu0 0
        %328 = vmatprep.subr.bf16.mxu0 0
        %329 = vmatpush1.bf16.msra.mxu0 0
        %330 = vmatprep.subr.bf16.mxu0 0
        %331 = vmatpush1.bf16.msra.mxu0 0
        %332 = vmatprep.subr.bf16.mxu0 0
        %333 = vmatpush1.bf16.msra.mxu0 0
        %334 = vmatprep.subr.bf16.mxu0 0
        %335 = vmatpush1.bf16.msra.mxu0 0
        %336 = vmatprep.subr.bf16.mxu0 0
        %337 = vmatpush1.bf16.msra.mxu0 0
        %338 = vmatprep.subr.bf16.mxu0 0
        %339 = vmatpush1.bf16.msra.mxu0 0
        %340 = vmatprep.subr.bf16.mxu0 0
        %341 = vmatpush1.bf16.msra.mxu0 0
        %342 = vmatprep.subr.bf16.mxu0 0
        %343 = vmatpush1.bf16.msra.mxu0 0
        %344 = vmatprep.subr.bf16.mxu0 0
        %345 = vmatpush1.bf16.msra.mxu0 0
        %346 = vmatprep.mubr.bf16.mxu0 0
        %347 = vmatmul.mubr.bf16.gmra.mrb[0].mxu0 %v308
        %v348 = vpop.f32.mrb[0].mxu0
        %v349 = vadd.f32 %v289, %v348
        %v350 = vpop.f32.mrb[0].mxu0
        %v351 = vpop.f32.mrb[0].mxu0
        %v352 = vpop.f32.mrb[0].mxu0
        %353 = vdwg.mxu0
        %v354 = vmax.f32 %v349, 0.0
        %v355 = vpack.c.bf16 %v354, %v354
        %vm356 = vcmask 1043456
        %vm357 = vcmask 596996
        %vm358 = vmor %vm357, %vm356
        %359 = vst.msk [vmem:[#allocation2] sm:$0xff] %vm358, 0
        %vm360 = vcmask 519168
        %361 = vst.msk [vmem:[#allocation2 + $0x4] sm:$0xf] %vm360, %v355
        %v362 = vld [vmem:[#allocation2] sm:$0xff]
        %v364 = vpack.i.b16 %v278, %v278
        %v366 = vlaneseq
        %v367 = vshrl.u32 %v366, 7
        %v368 = vsub.s32 0, %v367
        %v369 = vrot.slane %v364, %v368
        %v371 = vunpack.c.l.b16 %v369
        %v372 = vpack.c.b16 %v371, %v371
        %373 = vrot.lane.b32.xlu0 %v372, 119
        %v374 = vpop.permute.xlu0 %373
        %v375 = vrot.slane %v374, 4
        %vm376 = vcmask 973824
        %v377 = vsel %vm376, %v375, %v374
        %v379 = vmul.bf16 %v362, %v377
        %v380 = vld [vmem:[%s3] sm:$0xf]
        %s381 = scalar_lea.vmem %s3, 4
        %v382 = vld [vmem:[%s381] sm:$0xf]
        %v384 = vunpack.c.l.b16 %v362
        %v385 = vunpack.c.h.b16 %v362
        %v386 = vpack.c.b16 %v384, %v384
        %v387 = vpack.c.b16 %v385, %v385
        %388 = vrot.lane.b32.xlu0 %v386, 8
        %v389 = vpop.permute.xlu0 %388
        %390 = vrot.lane.b32.xlu0 %v387, 8
        %v391 = vpop.permute.xlu0 %390
        %vm392 = vcmask 64512
        %v393 = vsel %vm392, %v389, %v391
        %vm394 = vcmask 64512
        %v396 = vsel %vm394, %v382, 0
        %v399 = vsel %vm356, %v393, 0
        %401 = vmatprep.subr.bf16.mxu0 0
        %402 = vmatpush1.bf16.msra.mxu0 %v399
        %403 = vmatprep.subr.bf16.mxu0 0
        %404 = vmatpush1.bf16.msra.mxu0 0
        %405 = vmatprep.subr.bf16.mxu0 0
        %406 = vmatpush1.bf16.msra.mxu0 0
        %407 = vmatprep.subr.bf16.mxu0 0
        %408 = vmatpush1.bf16.msra.mxu0 0
        %409 = vmatprep.subr.bf16.mxu0 0
        %410 = vmatpush1.bf16.msra.mxu0 0
        %411 = vmatprep.subr.bf16.mxu0 0
        %412 = vmatpush1.bf16.msra.mxu0 0
        %413 = vmatprep.subr.bf16.mxu0 0
        %414 = vmatpush1.bf16.msra.mxu0 0
        %415 = vmatprep.subr.bf16.mxu0 0
        %416 = vmatpush1.bf16.msra.mxu0 0
        %417 = vmatprep.subr.bf16.mxu0 0
        %418 = vmatpush1.bf16.msra.mxu0 0
        %419 = vmatprep.subr.bf16.mxu0 0
        %420 = vmatpush1.bf16.msra.mxu0 0
        %421 = vmatprep.subr.bf16.mxu0 0
        %422 = vmatpush1.bf16.msra.mxu0 0
        %423 = vmatprep.subr.bf16.mxu0 0
        %424 = vmatpush1.bf16.msra.mxu0 0
        %425 = vmatprep.subr.bf16.mxu0 0
        %426 = vmatpush1.bf16.msra.mxu0 0
        %427 = vmatprep.subr.bf16.mxu0 0
        %428 = vmatpush1.bf16.msra.mxu0 0
        %429 = vmatprep.subr.bf16.mxu0 0
        %430 = vmatpush1.bf16.msra.mxu0 0
        %431 = vmatprep.subr.bf16.mxu0 0
        %432 = vmatpush1.bf16.msra.mxu0 0
        %433 = vmatprep.mubr.bf16.mxu0 0
        %434 = vmatmul.mubr.bf16.gmra.mrb[0].mxu0 %v396
        %v435 = vpop.f32.mrb[0].mxu0
        %v436 = vadd.f32 0.0, %v435
        %v437 = vpop.f32.mrb[0].mxu0
        %v438 = vpop.f32.mrb[0].mxu0
        %v439 = vpop.f32.mrb[0].mxu0
        %440 = vdwg.mxu0
        %v442 = vunpack.c.l.b16 %v379
        %v443 = vunpack.c.h.b16 %v379
        %v444 = vpack.c.b16 %v442, %v442
        %v445 = vpack.c.b16 %v443, %v443
        %446 = vrot.lane.b32.xlu0 %v444, 9
        %v447 = vpop.permute.xlu0 %446
        %448 = vrot.lane.b32.xlu0 %v445, 9
        %v449 = vpop.permute.xlu0 %448
        %vm450 = vcmask 72704
        %v451 = vsel %vm450, %v447, %v449
        %v453 = vsel %vm394, %v380, 0
        %v456 = vsel %vm356, %v451, 0
        %458 = vmatprep.subr.bf16.mxu0 0
        %459 = vmatpush1.bf16.msra.mxu0 %v456
        %460 = vmatprep.subr.bf16.mxu0 0
        %461 = vmatpush1.bf16.msra.mxu0 0
        %462 = vmatprep.subr.bf16.mxu0 0
        %463 = vmatpush1.bf16.msra.mxu0 0
        %464 = vmatprep.subr.bf16.mxu0 0
        %465 = vmatpush1.bf16.msra.mxu0 0
        %466 = vmatprep.subr.bf16.mxu0 0
        %467 = vmatpush1.bf16.msra.mxu0 0
        %468 = vmatprep.subr.bf16.mxu0 0
        %469 = vmatpush1.bf16.msra.mxu0 0
        %470 = vmatprep.subr.bf16.mxu0 0
        %471 = vmatpush1.bf16.msra.mxu0 0
        %472 = vmatprep.subr.bf16.mxu0 0
        %473 = vmatpush1.bf16.msra.mxu0 0
        %474 = vmatprep.subr.bf16.mxu0 0
        %475 = vmatpush1.bf16.msra.mxu0 0
        %476 = vmatprep.subr.bf16.mxu0 0
        %477 = vmatpush1.bf16.msra.mxu0 0
        %478 = vmatprep.subr.bf16.mxu0 0
        %479 = vmatpush1.bf16.msra.mxu0 0
        %480 = vmatprep.subr.bf16.mxu0 0
        %481 = vmatpush1.bf16.msra.mxu0 0
        %482 = vmatprep.subr.bf16.mxu0 0
        %483 = vmatpush1.bf16.msra.mxu0 0
        %484 = vmatprep.subr.bf16.mxu0 0
        %485 = vmatpush1.bf16.msra.mxu0 0
        %486 = vmatprep.subr.bf16.mxu0 0
        %487 = vmatpush1.bf16.msra.mxu0 0
        %488 = vmatprep.subr.bf16.mxu0 0
        %489 = vmatpush1.bf16.msra.mxu0 0
        %490 = vmatprep.mubr.bf16.mxu0 0
        %491 = vmatmul.mubr.bf16.gmra.mrb[0].mxu0 %v453
        %v492 = vpop.f32.mrb[0].mxu0
        %v493 = vadd.f32 %v436, %v492
        %v494 = vpop.f32.mrb[0].mxu0
        %v495 = vpop.f32.mrb[0].mxu0
        %v496 = vpop.f32.mrb[0].mxu0
        %497 = vdwg.mxu0
        %v498 = vshrl.u32 %v278, 16
        %v499 = vpack.i.b16 %v498, %v498
        %v501 = vlaneseq
        %v502 = vshrl.u32 %v501, 7
        %v503 = vsub.s32 0, %v502
        %v504 = vrot.slane %v499, %v503
        %v506 = vunpack.c.l.b16 %v504
        %v507 = vpack.c.b16 %v506, %v506
        %508 = vrot.lane.b32.xlu0 %v507, 121
        %v509 = vpop.permute.xlu0 %508
        %v510 = vrot.slane %v509, 4
        %vm511 = vcmask 990208
        %v512 = vsel %vm511, %v510, %v509
        %v514 = vmul.bf16 %v362, %v512
        %s515 = scalar_lea.vmem %s3, 8
        %v516 = vld [vmem:[%s515] sm:$0xf]
        %v518 = vunpack.c.l.b16 %v514
        %v519 = vunpack.c.h.b16 %v514
        %v520 = vpack.c.b16 %v518, %v518
        %v521 = vpack.c.b16 %v519, %v519
        %522 = vrot.lane.b32.xlu0 %v520, 7
        %v523 = vpop.permute.xlu0 %522
        %524 = vrot.lane.b32.xlu0 %v521, 7
        %v525 = vpop.permute.xlu0 %524
        %vm526 = vcmask 56320
        %v527 = vsel %vm526, %v523, %v525
        %v529 = vsel %vm394, %v516, 0
        %v532 = vsel %vm356, %v527, 0
        %534 = vmatprep.subr.bf16.mxu0 0
        %535 = vmatpush1.bf16.msra.mxu0 %v532
        %536 = vmatprep.subr.bf16.mxu0 0
        %537 = vmatpush1.bf16.msra.mxu0 0
        %538 = vmatprep.subr.bf16.mxu0 0
        %539 = vmatpush1.bf16.msra.mxu0 0
        %540 = vmatprep.subr.bf16.mxu0 0
        %541 = vmatpush1.bf16.msra.mxu0 0
        %542 = vmatprep.subr.bf16.mxu0 0
        %543 = vmatpush1.bf16.msra.mxu0 0
        %544 = vmatprep.subr.bf16.mxu0 0
        %545 = vmatpush1.bf16.msra.mxu0 0
        %546 = vmatprep.subr.bf16.mxu0 0
        %547 = vmatpush1.bf16.msra.mxu0 0
        %548 = vmatprep.subr.bf16.mxu0 0
        %549 = vmatpush1.bf16.msra.mxu0 0
        %550 = vmatprep.subr.bf16.mxu0 0
        %551 = vmatpush1.bf16.msra.mxu0 0
        %552 = vmatprep.subr.bf16.mxu0 0
        %553 = vmatpush1.bf16.msra.mxu0 0
        %554 = vmatprep.subr.bf16.mxu0 0
        %555 = vmatpush1.bf16.msra.mxu0 0
        %556 = vmatprep.subr.bf16.mxu0 0
        %557 = vmatpush1.bf16.msra.mxu0 0
        %558 = vmatprep.subr.bf16.mxu0 0
        %559 = vmatpush1.bf16.msra.mxu0 0
        %560 = vmatprep.subr.bf16.mxu0 0
        %561 = vmatpush1.bf16.msra.mxu0 0
        %562 = vmatprep.subr.bf16.mxu0 0
        %563 = vmatpush1.bf16.msra.mxu0 0
        %564 = vmatprep.subr.bf16.mxu0 0
        %565 = vmatpush1.bf16.msra.mxu0 0
        %566 = vmatprep.mubr.bf16.mxu0 0
        %567 = vmatmul.mubr.bf16.gmra.mrb[0].mxu0 %v529
        %v568 = vpop.f32.mrb[0].mxu0
        %v569 = vadd.f32 0.0, %v568
        %v570 = vpop.f32.mrb[0].mxu0
        %v571 = vpop.f32.mrb[0].mxu0
        %v572 = vpop.f32.mrb[0].mxu0
        %573 = vdwg.mxu0
        %v574 = vadd.f32 %v493, %v569
        %575 = vrot.lane.b32.xlu0 %v372, 127
        %v576 = vpop.permute.xlu0 %575
        %v577 = vrot.slane %v576, 4
        %vm578 = vcmask 1039360
        %v579 = vsel %vm578, %v577, %v576
        %v581 = vmul.bf16 %v362, %v579
        %s582 = scalar_lea.vmem %s3, 12
        %v583 = vld [vmem:[%s582] sm:$0xf]
        %v585 = vunpack.c.l.b16 %v581
        %v586 = vunpack.c.h.b16 %v581
        %v587 = vpack.c.b16 %v585, %v585
        %v588 = vpack.c.b16 %v586, %v586
        %589 = vrot.lane.b32.xlu0 %v587, 1
        %v590 = vpop.permute.xlu0 %589
        %591 = vrot.lane.b32.xlu0 %v588, 1
        %v592 = vpop.permute.xlu0 %591
        %vm593 = vcmask 7168
        %v594 = vsel %vm593, %v590, %v592
        %v596 = vsel %vm394, %v583, 0
        %v599 = vsel %vm356, %v594, 0
        %601 = vmatprep.subr.bf16.mxu0 0
        %602 = vmatpush1.bf16.msra.mxu0 %v599
        %603 = vmatprep.subr.bf16.mxu0 0
        %604 = vmatpush1.bf16.msra.mxu0 0
        %605 = vmatprep.subr.bf16.mxu0 0
        %606 = vmatpush1.bf16.msra.mxu0 0
        %607 = vmatprep.subr.bf16.mxu0 0
        %608 = vmatpush1.bf16.msra.mxu0 0
        %609 = vmatprep.subr.bf16.mxu0 0
        %610 = vmatpush1.bf16.msra.mxu0 0
        %611 = vmatprep.subr.bf16.mxu0 0
        %612 = vmatpush1.bf16.msra.mxu0 0
        %613 = vmatprep.subr.bf16.mxu0 0
        %614 = vmatpush1.bf16.msra.mxu0 0
        %615 = vmatprep.subr.bf16.mxu0 0
        %616 = vmatpush1.bf16.msra.mxu0 0
        %617 = vmatprep.subr.bf16.mxu0 0
        %618 = vmatpush1.bf16.msra.mxu0 0
        %619 = vmatprep.subr.bf16.mxu0 0
        %620 = vmatpush1.bf16.msra.mxu0 0
        %621 = vmatprep.subr.bf16.mxu0 0
        %622 = vmatpush1.bf16.msra.mxu0 0
        %623 = vmatprep.subr.bf16.mxu0 0
        %624 = vmatpush1.bf16.msra.mxu0 0
        %625 = vmatprep.subr.bf16.mxu0 0
        %626 = vmatpush1.bf16.msra.mxu0 0
        %627 = vmatprep.subr.bf16.mxu0 0
        %628 = vmatpush1.bf16.msra.mxu0 0
        %629 = vmatprep.subr.bf16.mxu0 0
        %630 = vmatpush1.bf16.msra.mxu0 0
        %631 = vmatprep.subr.bf16.mxu0 0
        %632 = vmatpush1.bf16.msra.mxu0 0
        %633 = vmatprep.mubr.bf16.mxu0 0
        %634 = vmatmul.mubr.bf16.gmra.mrb[0].mxu0 %v596
        %v635 = vpop.f32.mrb[0].mxu0
        %v636 = vadd.f32 0.0, %v635
        %v637 = vpop.f32.mrb[0].mxu0
        %v638 = vpop.f32.mrb[0].mxu0
        %v639 = vpop.f32.mrb[0].mxu0
        %640 = vdwg.mxu0
        %v641 = vadd.f32 %v574, %v636
        %v642 = vld [vmem:[#allocation2 + $0x4] sm:$0xf]
        %s643 = scalar_lea.vmem %s3, 16
        %v644 = vld [vmem:[%s643] sm:$0xf]
        %v646 = vsel %vm394, %v644, 0
        %v649 = vsel %vm356, %v642, 0
        %651 = vmatprep.subr.bf16.mxu0 0
        %652 = vmatpush1.bf16.msra.mxu0 %v649
        %653 = vmatprep.subr.bf16.mxu0 0
        %654 = vmatpush1.bf16.msra.mxu0 0
        %655 = vmatprep.subr.bf16.mxu0 0
        %656 = vmatpush1.bf16.msra.mxu0 0
        %657 = vmatprep.subr.bf16.mxu0 0
        %658 = vmatpush1.bf16.msra.mxu0 0
        %659 = vmatprep.subr.bf16.mxu0 0
        %660 = vmatpush1.bf16.msra.mxu0 0
        %661 = vmatprep.subr.bf16.mxu0 0
        %662 = vmatpush1.bf16.msra.mxu0 0
        %663 = vmatprep.subr.bf16.mxu0 0
        %664 = vmatpush1.bf16.msra.mxu0 0
        %665 = vmatprep.subr.bf16.mxu0 0
        %666 = vmatpush1.bf16.msra.mxu0 0
        %667 = vmatprep.subr.bf16.mxu0 0
        %668 = vmatpush1.bf16.msra.mxu0 0
        %669 = vmatprep.subr.bf16.mxu0 0
        %670 = vmatpush1.bf16.msra.mxu0 0
        %671 = vmatprep.subr.bf16.mxu0 0
        %672 = vmatpush1.bf16.msra.mxu0 0
        %673 = vmatprep.subr.bf16.mxu0 0
        %674 = vmatpush1.bf16.msra.mxu0 0
        %675 = vmatprep.subr.bf16.mxu0 0
        %676 = vmatpush1.bf16.msra.mxu0 0
        %677 = vmatprep.subr.bf16.mxu0 0
        %678 = vmatpush1.bf16.msra.mxu0 0
        %679 = vmatprep.subr.bf16.mxu0 0
        %680 = vmatpush1.bf16.msra.mxu0 0
        %681 = vmatprep.subr.bf16.mxu0 0
        %682 = vmatpush1.bf16.msra.mxu0 0
        %683 = vmatprep.mubr.bf16.mxu0 0
        %684 = vmatmul.mubr.bf16.gmra.mrb[0].mxu0 %v646
        %v685 = vpop.f32.mrb[0].mxu0
        %v686 = vadd.f32 0.0, %v685
        %v687 = vpop.f32.mrb[0].mxu0
        %v688 = vpop.f32.mrb[0].mxu0
        %v689 = vpop.f32.mrb[0].mxu0
        %690 = vdwg.mxu0
        %v691 = vadd.f32 %v641, %v686
        %692 = vrot.lane.b32.xlu0 %v507, 1
        %v693 = vpop.permute.xlu0 %692
        %v695 = vmul.bf16 %v642, %v693
        %s696 = scalar_lea.vmem %s3, 20
        %v697 = vld [vmem:[%s696] sm:$0xf]
        %v699 = vunpack.c.l.b16 %v695
        %v700 = vpack.c.b16 %v699, %v699
        %701 = vrot.lane.b32.xlu0 %v700, 127
        %v702 = vpop.permute.xlu0 %701
        %v704 = vsel %vm394, %v697, 0
        %v707 = vsel %vm356, %v702, 0
        %709 = vmatprep.subr.bf16.mxu0 0
        %710 = vmatpush1.bf16.msra.mxu0 %v707
        %711 = vmatprep.subr.bf16.mxu0 0
        %712 = vmatpush1.bf16.msra.mxu0 0
        %713 = vmatprep.subr.bf16.mxu0 0
        %714 = vmatpush1.bf16.msra.mxu0 0
        %715 = vmatprep.subr.bf16.mxu0 0
        %716 = vmatpush1.bf16.msra.mxu0 0
        %717 = vmatprep.subr.bf16.mxu0 0
        %718 = vmatpush1.bf16.msra.mxu0 0
        %719 = vmatprep.subr.bf16.mxu0 0
        %720 = vmatpush1.bf16.msra.mxu0 0
        %721 = vmatprep.subr.bf16.mxu0 0
        %722 = vmatpush1.bf16.msra.mxu0 0
        %723 = vmatprep.subr.bf16.mxu0 0
        %724 = vmatpush1.bf16.msra.mxu0 0
        %725 = vmatprep.subr.bf16.mxu0 0
        %726 = vmatpush1.bf16.msra.mxu0 0
        %727 = vmatprep.subr.bf16.mxu0 0
        %728 = vmatpush1.bf16.msra.mxu0 0
        %729 = vmatprep.subr.bf16.mxu0 0
        %730 = vmatpush1.bf16.msra.mxu0 0
        %731 = vmatprep.subr.bf16.mxu0 0
        %732 = vmatpush1.bf16.msra.mxu0 0
        %733 = vmatprep.subr.bf16.mxu0 0
        %734 = vmatpush1.bf16.msra.mxu0 0
        %735 = vmatprep.subr.bf16.mxu0 0
        %736 = vmatpush1.bf16.msra.mxu0 0
        %737 = vmatprep.subr.bf16.mxu0 0
        %738 = vmatpush1.bf16.msra.mxu0 0
        %739 = vmatprep.subr.bf16.mxu0 0
        %740 = vmatpush1.bf16.msra.mxu0 0
        %741 = vmatprep.mubr.bf16.mxu0 0
        %742 = vmatmul.mubr.bf16.gmra.mrb[0].mxu0 %v704
        %v743 = vpop.f32.mrb[0].mxu0
        %v744 = vadd.f32 0.0, %v743
        %v745 = vpop.f32.mrb[0].mxu0
        %v746 = vpop.f32.mrb[0].mxu0
        %v747 = vpop.f32.mrb[0].mxu0
        %748 = vdwg.mxu0
        %v749 = vadd.f32 %v691, %v744
        %750 = vrot.lane.b32.xlu0 %v372, 7
        %v751 = vpop.permute.xlu0 %750
        %v753 = vmul.bf16 %v642, %v751
        %s754 = scalar_lea.vmem %s3, 24
        %v755 = vld [vmem:[%s754] sm:$0xf]
        %v757 = vunpack.c.l.b16 %v753
        %v758 = vpack.c.b16 %v757, %v757
        %759 = vrot.lane.b32.xlu0 %v758, 121
        %v760 = vpop.permute.xlu0 %759
        %v762 = vsel %vm394, %v755, 0
        %v765 = vsel %vm356, %v760, 0
        %767 = vmatprep.subr.bf16.mxu0 0
        %768 = vmatpush1.bf16.msra.mxu0 %v765
        %769 = vmatprep.subr.bf16.mxu0 0
        %770 = vmatpush1.bf16.msra.mxu0 0
        %771 = vmatprep.subr.bf16.mxu0 0
        %772 = vmatpush1.bf16.msra.mxu0 0
        %773 = vmatprep.subr.bf16.mxu0 0
        %774 = vmatpush1.bf16.msra.mxu0 0
        %775 = vmatprep.subr.bf16.mxu0 0
        %776 = vmatpush1.bf16.msra.mxu0 0
        %777 = vmatprep.subr.bf16.mxu0 0
        %778 = vmatpush1.bf16.msra.mxu0 0
        %779 = vmatprep.subr.bf16.mxu0 0
        %780 = vmatpush1.bf16.msra.mxu0 0
        %781 = vmatprep.subr.bf16.mxu0 0
        %782 = vmatpush1.bf16.msra.mxu0 0
        %783 = vmatprep.subr.bf16.mxu0 0
        %784 = vmatpush1.bf16.msra.mxu0 0
        %785 = vmatprep.subr.bf16.mxu0 0
        %786 = vmatpush1.bf16.msra.mxu0 0
        %787 = vmatprep.subr.bf16.mxu0 0
        %788 = vmatpush1.bf16.msra.mxu0 0
        %789 = vmatprep.subr.bf16.mxu0 0
        %790 = vmatpush1.bf16.msra.mxu0 0
        %791 = vmatprep.subr.bf16.mxu0 0
        %792 = vmatpush1.bf16.msra.mxu0 0
        %793 = vmatprep.subr.bf16.mxu0 0
        %794 = vmatpush1.bf16.msra.mxu0 0
        %795 = vmatprep.subr.bf16.mxu0 0
        %796 = vmatpush1.bf16.msra.mxu0 0
        %797 = vmatprep.subr.bf16.mxu0 0
        %798 = vmatpush1.bf16.msra.mxu0 0
        %799 = vmatprep.mubr.bf16.mxu0 0
        %800 = vmatmul.mubr.bf16.gmra.mrb[0].mxu0 %v762
        %v801 = vpop.f32.mrb[0].mxu0
        %v802 = vadd.f32 0.0, %v801
        %v803 = vpop.f32.mrb[0].mxu0
        %v804 = vpop.f32.mrb[0].mxu0
        %v805 = vpop.f32.mrb[0].mxu0
        %806 = vdwg.mxu0
        %v807 = vadd.f32 %v749, %v802
        %s808 = scalar_lea.vmem %s3, 28
        %v809 = vld [vmem:[%s808] sm:$0xf]
        %v811 = vunpack.c.l.b16 %v642
        %v812 = vpack.c.b16 %v811, %v811
        %813 = vrot.lane.b32.xlu0 %v812, 120
        %v814 = vpop.permute.xlu0 %813
        %v816 = vsel %vm394, %v809, 0
        %v819 = vsel %vm356, %v814, 0
        %821 = vmatprep.subr.bf16.mxu0 0
        %822 = vmatpush1.bf16.msra.mxu0 %v819
        %823 = vmatprep.subr.bf16.mxu0 0
        %824 = vmatpush1.bf16.msra.mxu0 0
        %825 = vmatprep.subr.bf16.mxu0 0
        %826 = vmatpush1.bf16.msra.mxu0 0
        %827 = vmatprep.subr.bf16.mxu0 0
        %828 = vmatpush1.bf16.msra.mxu0 0
        %829 = vmatprep.subr.bf16.mxu0 0
        %830 = vmatpush1.bf16.msra.mxu0 0
        %831 = vmatprep.subr.bf16.mxu0 0
        %832 = vmatpush1.bf16.msra.mxu0 0
        %833 = vmatprep.subr.bf16.mxu0 0
        %834 = vmatpush1.bf16.msra.mxu0 0
        %835 = vmatprep.subr.bf16.mxu0 0
        %836 = vmatpush1.bf16.msra.mxu0 0
        %837 = vmatprep.subr.bf16.mxu0 0
        %838 = vmatpush1.bf16.msra.mxu0 0
        %839 = vmatprep.subr.bf16.mxu0 0
        %840 = vmatpush1.bf16.msra.mxu0 0
        %841 = vmatprep.subr.bf16.mxu0 0
        %842 = vmatpush1.bf16.msra.mxu0 0
        %843 = vmatprep.subr.bf16.mxu0 0
        %844 = vmatpush1.bf16.msra.mxu0 0
        %845 = vmatprep.subr.bf16.mxu0 0
        %846 = vmatpush1.bf16.msra.mxu0 0
        %847 = vmatprep.subr.bf16.mxu0 0
        %848 = vmatpush1.bf16.msra.mxu0 0
        %849 = vmatprep.subr.bf16.mxu0 0
        %850 = vmatpush1.bf16.msra.mxu0 0
        %851 = vmatprep.subr.bf16.mxu0 0
        %852 = vmatpush1.bf16.msra.mxu0 0
        %853 = vmatprep.mubr.bf16.mxu0 0
        %854 = vmatmul.mubr.bf16.gmra.mrb[0].mxu0 %v816
        %v855 = vpop.f32.mrb[0].mxu0
        %v856 = vadd.f32 0.0, %v855
        %v857 = vpop.f32.mrb[0].mxu0
        %v858 = vpop.f32.mrb[0].mxu0
        %v859 = vpop.f32.mrb[0].mxu0
        %860 = vdwg.mxu0
        %v861 = vadd.f32 %v807, %v856
        %862 = vrot.lane.b32.xlu0 %v507, 9
        %v863 = vpop.permute.xlu0 %862
        %v865 = vmul.bf16 %v642, %v863
        %s866 = scalar_lea.vmem %s3, 32
        %v867 = vld [vmem:[%s866] sm:$0xf]
        %v869 = vunpack.c.l.b16 %v865
        %v870 = vpack.c.b16 %v869, %v869
        %871 = vrot.lane.b32.xlu0 %v870, 119
        %v872 = vpop.permute.xlu0 %871
        %v874 = vsel %vm394, %v867, 0
        %v877 = vsel %vm356, %v872, 0
        %879 = vmatprep.subr.bf16.mxu0 0
        %880 = vmatpush1.bf16.msra.mxu0 %v877
        %881 = vmatprep.subr.bf16.mxu0 0
        %882 = vmatpush1.bf16.msra.mxu0 0
        %883 = vmatprep.subr.bf16.mxu0 0
        %884 = vmatpush1.bf16.msra.mxu0 0
        %885 = vmatprep.subr.bf16.mxu0 0
        %886 = vmatpush1.bf16.msra.mxu0 0
        %887 = vmatprep.subr.bf16.mxu0 0
        %888 = vmatpush1.bf16.msra.mxu0 0
        %889 = vmatprep.subr.bf16.mxu0 0
        %890 = vmatpush1.bf16.msra.mxu0 0
        %891 = vmatprep.subr.bf16.mxu0 0
        %892 = vmatpush1.bf16.msra.mxu0 0
        %893 = vmatprep.subr.bf16.mxu0 0
        %894 = vmatpush1.bf16.msra.mxu0 0
        %895 = vmatprep.subr.bf16.mxu0 0
        %896 = vmatpush1.bf16.msra.mxu0 0
        %897 = vmatprep.subr.bf16.mxu0 0
        %898 = vmatpush1.bf16.msra.mxu0 0
        %899 = vmatprep.subr.bf16.mxu0 0
        %900 = vmatpush1.bf16.msra.mxu0 0
        %901 = vmatprep.subr.bf16.mxu0 0
        %902 = vmatpush1.bf16.msra.mxu0 0
        %903 = vmatprep.subr.bf16.mxu0 0
        %904 = vmatpush1.bf16.msra.mxu0 0
        %905 = vmatprep.subr.bf16.mxu0 0
        %906 = vmatpush1.bf16.msra.mxu0 0
        %907 = vmatprep.subr.bf16.mxu0 0
        %908 = vmatpush1.bf16.msra.mxu0 0
        %909 = vmatprep.subr.bf16.mxu0 0
        %910 = vmatpush1.bf16.msra.mxu0 0
        %911 = vmatprep.mubr.bf16.mxu0 0
        %912 = vmatmul.mubr.bf16.gmra.mrb[0].mxu0 %v874
        %v913 = vpop.f32.mrb[0].mxu0
        %v914 = vadd.f32 0.0, %v913
        %v915 = vpop.f32.mrb[0].mxu0
        %v916 = vpop.f32.mrb[0].mxu0
        %v917 = vpop.f32.mrb[0].mxu0
        %918 = vdwg.mxu0
        %v919 = vadd.f32 %v861, %v914
        %v920 = vld [vmem:[%s4] sm:$0xff]
        %922 = vset.pattern.permute.xlu0 0
        %923 = vperm.xlu0 %922, %v920
        %v924 = vpop.permute.xlu0 %923
        %v926 = vadd.f32 %v919, %v924
        %v927 = vld [vmem:[%s276 + $0x8] sm:$0x3]
        %v928 = vld [vmem:[%s6] sm:$0xf]
        %vm929 = vcmask 31744
        %v931 = vsel %vm929, %v928, 0
        %v934 = vsel %vm310, %v927, 0
        %936 = vmatprep.subr.bf16.mxu0 0
        %937 = vmatpush1.bf16.msra.mxu0 %v934
        %938 = vmatprep.subr.bf16.mxu0 0
        %939 = vmatpush1.bf16.msra.mxu0 0
        %940 = vmatprep.subr.bf16.mxu0 0
        %941 = vmatpush1.bf16.msra.mxu0 0
        %942 = vmatprep.subr.bf16.mxu0 0
        %943 = vmatpush1.bf16.msra.mxu0 0
        %944 = vmatprep.subr.bf16.mxu0 0
        %945 = vmatpush1.bf16.msra.mxu0 0
        %946 = vmatprep.subr.bf16.mxu0 0
        %947 = vmatpush1.bf16.msra.mxu0 0
        %948 = vmatprep.subr.bf16.mxu0 0
        %949 = vmatpush1.bf16.msra.mxu0 0
        %950 = vmatprep.subr.bf16.mxu0 0
        %951 = vmatpush1.bf16.msra.mxu0 0
        %952 = vmatprep.subr.bf16.mxu0 0
        %953 = vmatpush1.bf16.msra.mxu0 0
        %954 = vmatprep.subr.bf16.mxu0 0
        %955 = vmatpush1.bf16.msra.mxu0 0
        %956 = vmatprep.subr.bf16.mxu0 0
        %957 = vmatpush1.bf16.msra.mxu0 0
        %958 = vmatprep.subr.bf16.mxu0 0
        %959 = vmatpush1.bf16.msra.mxu0 0
        %960 = vmatprep.subr.bf16.mxu0 0
        %961 = vmatpush1.bf16.msra.mxu0 0
        %962 = vmatprep.subr.bf16.mxu0 0
        %963 = vmatpush1.bf16.msra.mxu0 0
        %964 = vmatprep.subr.bf16.mxu0 0
        %965 = vmatpush1.bf16.msra.mxu0 0
        %966 = vmatprep.subr.bf16.mxu0 0
        %967 = vmatpush1.bf16.msra.mxu0 0
        %968 = vmatprep.mubr.bf16.mxu0 0
        %969 = vmatmul.mubr.bf16.gmra.mrb[0].mxu0 %v931
        %v970 = vpop.f32.mrb[0].mxu0
        %v971 = vadd.f32 0.0, %v970
        %v972 = vpop.f32.mrb[0].mxu0
        %v973 = vpop.f32.mrb[0].mxu0
        %v974 = vpop.f32.mrb[0].mxu0
        %975 = vdwg.mxu0
        %v976 = vadd.f32 %v926, %v971
        %v977 = vmax.f32 %v976, 0.0
        %vm978 = vcmask 523264
        %979 = vst.msk [vmem:[%s271] sm:$0xff] %vm978, %v977
        %s980 = sand.u32 %s181, 1
        %s981 = scalar_lea.sflag [#allocation4], %s980
        %s982 = sand.u32 %s181, 1
        %s983 = smul.addr %s982, 8
        %s984 = scalar_lea.vmem [#allocation3], %s983
        // Predicated region
        $region49: #{tpu_custom_call.1} parent=47 // pred_check
          %p985 = pneg %p191
        $region50: #{tpu_custom_call.1} parent=47 // pred_check_branch
          %987 = sbr.rel (%p985) target = $region52
        $region51: #{tpu_custom_call.1} parent=47 // pred_region
          %s989 = ssub.s32 128, 128
          %990 = vsyncadd %s981, %s989
          %s991 = smul.addr %s21, 128
          %s992 = scalar_lea.hbm %s7, %s991
          %s994 = sshll.u32 %s984, 4
          %s995 = int_to_ptr.vmem [resolvable:$true] %s994
          %997 = dma.vmem_to_hbm [thread:$0]  %s995, 128, %s992, %s981
        $region52: #{tpu_custom_call.1} parent=47 // pred_fallthru
          _
      $region48: #{tpu_custom_call.1} parent=5 // pred_fallthru
        _
      %p998 = scmp.le.s32.totalorder 2, %s16
      // Predicated region
      $region53: #{tpu_custom_call.1} parent=5 // pred_check
        %p999 = pneg %p998
      $region54: #{tpu_custom_call.1} parent=5 // pred_check_branch
        %1001 = sbr.rel (%p999) target = $region56
      $region55: #{tpu_custom_call.1} parent=5 // pred_region
        %s1002 = ssub.s32 %s16, 2
        // Predicated region
        $region57: #{tpu_custom_call.1} parent=55 // pred_check
          %p1003 = pneg %p197
        $region58: #{tpu_custom_call.1} parent=55 // pred_check_branch
          %1005 = sbr.rel (%p1003) target = $region60
        $region59: #{tpu_custom_call.1} parent=55 // pred_region
          %s1006 = sand.u32 %s182, 1
          %s1007 = scalar_lea.sflag [#allocation4], %s1006
          %s1008 = sand.u32 %s182, 1
          %s1009 = smul.addr %s1008, 8
          %s1010 = scalar_lea.vmem [#allocation3], %s1009
          %1011 = dma.done %s1007, 128
        $region60: #{tpu_custom_call.1} parent=55 // pred_fallthru
          _
      $region56: #{tpu_custom_call.1} parent=5 // pred_fallthru
        _
    $region6: #{tpu_custom_call.1} parent=1 // loop_footer
      %s20 = sadd.s32 1, %s16
    $region7: #{tpu_custom_call.1} parent=1 // loop_footer_branch
      %15 = sbr.rel target = $region3
    $region8: #{tpu_custom_call.1} parent=1 // loop_exit
      _
    %1012 = vsyncpa [#allocation4], 1
    %s1013 = scalar_lea.sflag [#allocation4], 1
    %1014 = vsyncpa %s1013, 1

</llo_original>
